<compile_context>
chip_gen: v7x
topology: tpu7x:2x2x1
jax: 0.10.0
libtpu: 0.0.40
codegen_flags: <defaults>
</compile_context>

<pallas_src>
import functools

import jax
import jax.numpy as jnp
from jax import lax
from jax.experimental import pallas as pl
from jax.experimental.pallas import tpu as pltpu


def _dsconv_kernel(x_ref, dww_ref, pww_ref, pwb_ref, o_ref, xp_ref, *,
                   k, pad, l_in, tile_l, chunk_l, nt):
    """One (batch, L-tile) grid step.

    x_ref  : (C, L_in)    un-padded input row of this batch element (HBM-read once per batch)
    dww_ref: (C, K)       depthwise weights
    pww_ref: (O, C)       pointwise weights
    pwb_ref: (O, 1)       fused bias  (pw_b + pw_w @ dw_b)
    o_ref  : (O, TILE_L)  output tile, lane-dense along L (partial last block masked by Pallas)
    xp_ref : (C, NT*TILE_L + K - 1)  persistent VMEM staging row; col q <-> global col q - pad
    """
    c = x_ref.shape[0]
    w_tot = xp_ref.shape[1]
    j = pl.program_id(1)

    # Stage the input row into the halo scratch once per batch element (j == 0).
    # Zero-fill only the halo / round-up tail; no HBM traffic involved.
    @pl.when(j == 0)
    def _build():
        if pad > 0:
            xp_ref[:, 0:pad] = jnp.zeros((c, pad), xp_ref.dtype)
        xp_ref[:, pad:pad + l_in] = x_ref[...]
        tail = w_tot - pad - l_in
        if tail > 0:
            xp_ref[:, pad + l_in:w_tot] = jnp.zeros((c, tail), xp_ref.dtype)

    dww = dww_ref[...].astype(jnp.float32)            # (C, K)
    pww = pww_ref[...].astype(jnp.float32)            # (O, C)
    pwb = pwb_ref[...].astype(jnp.float32)            # (O, 1)

    # Inner chunk loop: one big output block per grid step (few grid steps), but each
    # chunk's live values (window, f32 accumulator, matmul result) stay within ~30 vregs.
    off = 0
    while off < tile_l:                               # static Python loop (<= 8 chunks)
        cl = min(chunk_l, tile_l - off)
        if nt == 1:
            win = xp_ref[:, off:off + cl + k - 1]     # fully static slice
        else:
            start = pl.multiple_of(j * tile_l + off, 128)
            win = xp_ref[:, pl.ds(start, cl + k - 1)]
        win = win.astype(jnp.float32)

        # Depthwise conv: K static lane-shifted slices, each scaled by a per-channel tap.
        acc = jnp.zeros((c, cl), jnp.float32)
        for t in range(k):                            # K is small & static
            acc = acc + win[:, t:t + cl] * dww[:, t:t + 1]

        # Pointwise 1x1 conv == one 2-D (O, C) x (C, cl) matmul (MXU), lane-dense result.
        y = jnp.dot(pww, acc, preferred_element_type=jnp.float32) + pwb
        o_ref[:, off:off + cl] = y.astype(o_ref.dtype)
        off += cl


def _vmem_limit_bytes():
    cap = 128 * 1024 * 1024
    try:
        cap = int(pltpu.get_tpu_info().vmem_capacity_bytes)
    except Exception:
        pass
    return int(min(100 * 1024 * 1024, cap * 7 // 8))


def depthwise_separable_conv(x_ncl, dw_w, dw_b, pw_w, pw_b, *,
                             max_tile_l=4096, chunk_l=512):
    """x_ncl: (N, C, L) as in PyTorch. Returns (N, out_ch, L_out)."""
    n, c, l_in = x_ncl.shape
    k = dw_w.shape[-1]
    pad = k // 2
    out_ch = pw_w.shape[0]
    l_out = l_in + 2 * pad - k + 1       # == l_in for odd k (matches Conv1d padding=k//2)

    # L tiling: single full-extent tile for short signals, else lane-dense (128-multiple)
    # tiles sized to minimize round-up waste at <= max_tile_l.
    if l_out <= max_tile_l:
        tile_l, nt = l_out, 1
    else:
        max_t = max(128, (max_tile_l // 128) * 128)
        nt = pl.cdiv(l_out, max_t)
        tile_l = max(128, ((pl.cdiv(l_out, nt) + 127) // 128) * 128)
        nt = pl.cdiv(l_out, tile_l)
    chunk = min(chunk_l, tile_l)

    w_tot = nt * tile_l + k - 1          # staging scratch width (halo + round-up tail)

    dww = dw_w[:, 0, :]                  # (C, K)  depthwise (groups=in_ch)
    pww = pw_w[:, :, 0]                  # (O, C)
    # Fold depthwise bias into pointwise bias: pw(dw(x) + db) = pww @ dw(x) + (pww @ db + pb)
    pwb = (pw_b + pww @ dw_b).reshape(out_ch, 1)

    kernel = functools.partial(_dsconv_kernel, k=k, pad=pad, l_in=l_in,
                               tile_l=tile_l, chunk_l=chunk, nt=nt)

    itemsize = x_ncl.dtype.itemsize
    flops = 2 * n * l_out * c * (k + out_ch)
    bytes_accessed = (itemsize * (n * c * l_in + n * out_ch * l_out)
                      + 4 * (c * k + out_ch * c + out_ch))

    out = pl.pallas_call(
        kernel,
        out_shape=jax.ShapeDtypeStruct((n, out_ch, l_out), x_ncl.dtype),
        grid=(n, nt),
        in_specs=[
            # Un-padded row per batch element; block index independent of j => HBM-read once.
            pl.BlockSpec((None, c, l_in), lambda b, j: (b, 0, 0)),
            pl.BlockSpec((c, k), lambda b, j: (0, 0)),
            pl.BlockSpec((out_ch, c), lambda b, j: (0, 0)),
            pl.BlockSpec((out_ch, 1), lambda b, j: (0, 0)),
        ],
        out_specs=pl.BlockSpec((None, out_ch, tile_l), lambda b, j: (b, 0, j)),
        scratch_shapes=[pltpu.VMEM((c, w_tot), x_ncl.dtype)],
        compiler_params=pltpu.CompilerParams(
            # Only the batch axis may be split across TensorCores; the L axis carries the
            # per-batch scratch dependency (and would duplicate x traffic if split).
            dimension_semantics=("parallel", "arbitrary"),
            vmem_limit_bytes=_vmem_limit_bytes()),
        cost_estimate=pl.CostEstimate(
            flops=flops, transcendentals=0, bytes_accessed=bytes_accessed),
    )(x_ncl, dww, pww, pwb)

    return out


def _reference(x_ncl, dw_w, dw_b, pw_w, pw_b):
    """Pure-JAX reference mirroring nn.Conv1d semantics."""
    k = dw_w.shape[-1]
    pad = k // 2
    z = lax.conv_general_dilated(
        x_ncl, dw_w,
        window_strides=(1,), padding=[(pad, pad)],
        dimension_numbers=("NCH", "OIH", "NCH"),
        feature_group_count=x_ncl.shape[1],
    ) + dw_b[None, :, None]
    y = lax.conv_general_dilated(
        z, pw_w,
        window_strides=(1,), padding=[(0, 0)],
        dimension_numbers=("NCH", "OIH", "NCH"),
    ) + pw_b[None, :, None]
    return y


if __name__ == "__main__":
    N, IN_CH, OUT_CH = 2, 4, 8
    key = jax.random.PRNGKey(0)
    k_x, k_dw, k_db, k_pw, k_pb = jax.random.split(key, 5)

    def make_weights(ksz):
        dw_w = jax.random.normal(k_dw, (IN_CH, 1, ksz), dtype=jnp.float32) * 0.1
        dw_b = jax.random.normal(k_db, (IN_CH,), dtype=jnp.float32) * 0.1
        pw_w = jax.random.normal(k_pw, (OUT_CH, IN_CH, 1), dtype=jnp.float32) * 0.1
        pw_b = jax.random.normal(k_pb, (OUT_CH,), dtype=jnp.float32) * 0.1
        return dw_w, dw_b, pw_w, pw_b

    def check(L, ksz, **kwargs):
        dw_w, dw_b, pw_w, pw_b = make_weights(ksz)
        x = jax.random.normal(k_x, (N, IN_CH, L), dtype=jnp.float32)
        out = jax.block_until_ready(
            depthwise_separable_conv(x, dw_w, dw_b, pw_w, pw_b, **kwargs))
        ref = _reference(x, dw_w, dw_b, pw_w, pw_b)
        assert out.shape == ref.shape, (out.shape, ref.shape)
        assert jnp.allclose(out, ref, atol=1e-5, rtol=1e-5), f"mismatch L={L} k={ksz}"

    # 1) Tiny spec-consistent shapes (single tile, single chunk).
    check(16, 3)
    # 2) Lane-dense length (unmasked stores / full-width matmul path).
    check(256, 3)
    # 3) Single tile but multiple inner chunks (ragged final chunk).
    check(600, 3)
    # 4) Multi-tile path with a partial last output block (nt = 3, tile_l = 256).
    check(600, 3, max_tile_l=256)
    # 5) Even kernel size (output length L + 1, asymmetric halo).
    check(16, 4)

    print("KERNEL_OK")
</pallas_src>

<mosaic_0001>
module attributes {stable_mosaic.version = 11 : i64} {
  func.func @_dsconv_kernel(%arg0: i32, %arg1: i32, %arg2: memref<1x4x16xf32, #tpu.memory_space<vmem>>, %arg3: memref<4x3xf32, #tpu.memory_space<vmem>>, %arg4: memref<8x4xf32, #tpu.memory_space<vmem>>, %arg5: memref<8x1xf32, #tpu.memory_space<vmem>>, %arg6: memref<1x8x16xf32, #tpu.memory_space<vmem>>, %arg7: memref<4x18xf32, #tpu.memory_space<vmem>>) attributes {dimension_semantics = [#tpu.dimension_semantics<parallel>, #tpu.dimension_semantics<arbitrary>], iteration_bounds = array<i64: 2, 1>, scalar_prefetch = 0 : i64, scratch_operands = 1 : i64, tpu.core_type = #tpu.core_type<tc>, window_params = [{transform_indices = @transform_0, window_bounds = array<i64: 1, 4, 16>}, {pipeline_mode = #tpu.pipeline_mode<synchronous>, transform_indices = @transform_1, window_bounds = array<i64: 4, 3>}, {pipeline_mode = #tpu.pipeline_mode<synchronous>, transform_indices = @transform_2, window_bounds = array<i64: 8, 4>}, {pipeline_mode = #tpu.pipeline_mode<synchronous>, transform_indices = @transform_3, window_bounds = array<i64: 8, 1>}, {transform_indices = @transform_4, window_bounds = array<i64: 1, 8, 16>}]} {
    %c0_i32 = arith.constant 0 : i32
    %0 = arith.cmpi eq, %arg1, %c0_i32 : i32
    %1 = arith.extui %0 : i1 to i32
    %c0_i32_0 = arith.constant 0 : i32
    %2 = arith.cmpi ne, %1, %c0_i32_0 : i32
    scf.if %2 {
      %cst_12 = arith.constant 0.000000e+00 : f32
      %29 = vector.broadcast %cst_12 : f32 to vector<4x1xf32>
      %c0_13 = arith.constant 0 : index
      %c0_14 = arith.constant 0 : index
      %30 = vector.load %arg7[%c0_13, %c0_14] : memref<4x18xf32, #tpu.memory_space<vmem>>, vector<4x1xf32>
      tpu.vector_store %arg7[%c0_13, %c0_14], %29 {strides = array<i32>} : memref<4x18xf32, #tpu.memory_space<vmem>>, vector<4x1xf32>,
      %c0_15 = arith.constant 0 : index
      %c0_16 = arith.constant 0 : index
      %c0_17 = arith.constant 0 : index
      %31 = vector.load %arg2[%c0_15, %c0_16, %c0_17] : memref<1x4x16xf32, #tpu.memory_space<vmem>>, vector<1x4x16xf32>
      %32 = vector.shape_cast %31 : vector<1x4x16xf32> to vector<4x16xf32>
      %c0_18 = arith.constant 0 : index
      %c1 = arith.constant 1 : index
      %33 = vector.load %arg7[%c0_18, %c1] : memref<4x18xf32, #tpu.memory_space<vmem>>, vector<4x16xf32>
      tpu.vector_store %arg7[%c0_18, %c1], %32 {strides = array<i32>} : memref<4x18xf32, #tpu.memory_space<vmem>>, vector<4x16xf32>,
      %cst_19 = arith.constant 0.000000e+00 : f32
      %34 = vector.broadcast %cst_19 : f32 to vector<4x1xf32>
      %c0_20 = arith.constant 0 : index
      %c17 = arith.constant 17 : index
      %35 = vector.load %arg7[%c0_20, %c17] : memref<4x18xf32, #tpu.memory_space<vmem>>, vector<4x1xf32>
      tpu.vector_store %arg7[%c0_20, %c17], %34 {strides = array<i32>} : memref<4x18xf32, #tpu.memory_space<vmem>>, vector<4x1xf32>,
    } else {
    }
    %c0 = arith.constant 0 : index
    %c0_1 = arith.constant 0 : index
    %3 = vector.load %arg3[%c0, %c0_1] : memref<4x3xf32, #tpu.memory_space<vmem>>, vector<4x3xf32>
    %c0_2 = arith.constant 0 : index
    %c0_3 = arith.constant 0 : index
    %4 = vector.load %arg4[%c0_2, %c0_3] : memref<8x4xf32, #tpu.memory_space<vmem>>, vector<8x4xf32>
    %c0_4 = arith.constant 0 : index
    %c0_5 = arith.constant 0 : index
    %5 = vector.load %arg5[%c0_4, %c0_5] : memref<8x1xf32, #tpu.memory_space<vmem>>, vector<8x1xf32>
    %c0_6 = arith.constant 0 : index
    %c0_7 = arith.constant 0 : index
    %6 = vector.load %arg7[%c0_6, %c0_7] : memref<4x18xf32, #tpu.memory_space<vmem>>, vector<4x18xf32>
    %cst = arith.constant 0.000000e+00 : f32
    %7 = vector.broadcast %cst : f32 to vector<4x16xf32>
    %8 = vector.extract_strided_slice %6 {offsets = [0, 0], sizes = [4, 16], strides = [1, 1]} : vector<4x18xf32> to vector<4x16xf32>
    %9 = vector.extract_strided_slice %3 {offsets = [0, 0], sizes = [4, 1], strides = [1, 1]} : vector<4x3xf32> to vector<4x1xf32>
    %10 = vector.broadcast %9 : vector<4x1xf32> to vector<4x16xf32>
    %11 = arith.mulf %8, %10 : vector<4x16xf32>
    %12 = arith.addf %7, %11 : vector<4x16xf32>
    %13 = vector.extract_strided_slice %6 {offsets = [0, 1], sizes = [4, 16], strides = [1, 1]} : vector<4x18xf32> to vector<4x16xf32>
    %14 = vector.extract_strided_slice %3 {offsets = [0, 1], sizes = [4, 1], strides = [1, 1]} : vector<4x3xf32> to vector<4x1xf32>
    %15 = vector.broadcast %14 : vector<4x1xf32> to vector<4x16xf32>
    %16 = arith.mulf %13, %15 : vector<4x16xf32>
    %17 = arith.addf %12, %16 : vector<4x16xf32>
    %18 = vector.extract_strided_slice %6 {offsets = [0, 2], sizes = [4, 16], strides = [1, 1]} : vector<4x18xf32> to vector<4x16xf32>
    %19 = vector.extract_strided_slice %3 {offsets = [0, 2], sizes = [4, 1], strides = [1, 1]} : vector<4x3xf32> to vector<4x1xf32>
    %20 = vector.broadcast %19 : vector<4x1xf32> to vector<4x16xf32>
    %21 = arith.mulf %18, %20 : vector<4x16xf32>
    %22 = arith.addf %17, %21 : vector<4x16xf32>
    %cst_8 = arith.constant dense<0.000000e+00> : vector<8x16xf32>
    %23 = tpu.matmul %4, %22, %cst_8 {dimension_numbers = #tpu.dot_dimension_numbers<[1], [0], [0], [1], [0, 0, 1, 1], [], []>} : vector<8x4xf32>, vector<4x16xf32>, vector<8x16xf32> -> vector<8x16xf32>
    %24 = vector.broadcast %5 : vector<8x1xf32> to vector<8x16xf32>
    %25 = arith.addf %23, %24 : vector<8x16xf32>
    %c0_9 = arith.constant 0 : index
    %c0_10 = arith.constant 0 : index
    %c0_11 = arith.constant 0 : index
    %26 = vector.load %arg6[%c0_9, %c0_10, %c0_11] : memref<1x8x16xf32, #tpu.memory_space<vmem>>, vector<1x8x16xf32>
    %27 = vector.shape_cast %26 : vector<1x8x16xf32> to vector<8x16xf32>
    %28 = vector.shape_cast %25 : vector<8x16xf32> to vector<1x8x16xf32>
    tpu.vector_store %arg6[%c0_9, %c0_10, %c0_11], %28 {strides = array<i32>} : memref<1x8x16xf32, #tpu.memory_space<vmem>>, vector<1x8x16xf32>,
    return
  }
  func.func @transform_0(%arg0: i32, %arg1: i32) -> (i32, i32, i32) {
    %c0_i32 = arith.constant 0 : i32
    %c0_i32_0 = arith.constant 0 : i32
    %c0_i32_1 = arith.constant 0 : i32
    return %arg0, %c0_i32, %c0_i32_0 : i32, i32, i32
  }
  func.func @transform_1(%arg0: i32, %arg1: i32) -> (i32, i32) {
    %c0_i32 = arith.constant 0 : i32
    %c0_i32_0 = arith.constant 0 : i32
    %c0_i32_1 = arith.constant 0 : i32
    return %c0_i32, %c0_i32_0 : i32, i32
  }
  func.func @transform_2(%arg0: i32, %arg1: i32) -> (i32, i32) {
    %c0_i32 = arith.constant 0 : i32
    %c0_i32_0 = arith.constant 0 : i32
    %c0_i32_1 = arith.constant 0 : i32
    return %c0_i32, %c0_i32_0 : i32, i32
  }
  func.func @transform_3(%arg0: i32, %arg1: i32) -> (i32, i32) {
    %c0_i32 = arith.constant 0 : i32
    %c0_i32_0 = arith.constant 0 : i32
    %c0_i32_1 = arith.constant 0 : i32
    return %c0_i32, %c0_i32_0 : i32, i32
  }
  func.func @transform_4(%arg0: i32, %arg1: i32) -> (i32, i32, i32) {
    %c0_i32 = arith.constant 0 : i32
    %c0_i32_0 = arith.constant 0 : i32
    return %arg0, %c0_i32, %arg1 : i32, i32, i32
  }
}

</mosaic_0001>

<llo_original>
// kernel: tpu_custom_call.1
$region0: #{tpu_custom_call.1}
  #allocation0 [shape = 'u32[]', space=smem, size = 0x4, offset = 0x4, fixed_abs, tag = 'smem constant byte address 0x4 - core index']
  #allocation1 [shape = 'u32[144,128]{1,0:T(1,128)}', space=vmem, size = 0x12000, scoped, tag = 'internal scratch']
  #allocation2 [shape = 'f32[4,18]{1,0:T(4,128)}', space=vmem, size = 0x800, scoped, tag = 'scratch operand']
  %s0 = inlined_call_operand.hbm [shape: f32[2,4,16], index: 0, kind: input, shape index: {}]
  %s1 = inlined_call_operand.hbm [shape: f32[4,3], index: 1, kind: input, shape index: {}]
  %s2 = inlined_call_operand.hbm [shape: f32[8,4], index: 2, kind: input, shape index: {}]
  %s3 = inlined_call_operand.hbm [shape: f32[8,1], index: 3, kind: input, shape index: {}]
  %s4 = inlined_call_operand.hbm [shape: f32[2,8,16], index: 4, kind: output, shape index: {}]
  %s5 = sld [smem:[#allocation0]]
  $region69: #{tpu_custom_call.1} parent=0
    _
  %s7 = ssub.s32 1, %s5
  %s8 = scalar_select 0, %s7, %s5
  $region1: #{tpu_custom_call.1} parent=0
    #allocation3 [shape = 'u8[4096]{0}', space=vmem, size = 0x1000, scoped, tag = 'input window, operand 0']
    #allocation4 [shape = 's32[2]{0}', space=sflag, size = 0x8, scoped, tag = 'scoped memory for tpu_custom_call.1']
    #allocation5 [shape = 's32[2]{0}', space=sflag, size = 0x8, scoped, tag = 'scoped memory for tpu_custom_call.1']
    #allocation6 [shape = 'u8[2048]{0}', space=vmem, size = 0x800, scoped, tag = 'input window, operand 1, single buffered']
    #allocation7 [shape = 's32[1]{0}', space=sflag, size = 0x4, scoped, tag = 'scoped memory for tpu_custom_call.1']
    #allocation8 [shape = 'u8[4096]{0}', space=vmem, size = 0x1000, scoped, tag = 'input window, operand 2, single buffered']
    #allocation9 [shape = 'u8[4096]{0}', space=vmem, size = 0x1000, scoped, tag = 'input window, operand 3, single buffered']
    #allocation10 [shape = 's32[1]{0}', space=sflag, size = 0x4, scoped, tag = 'scoped memory for tpu_custom_call.1']
    #allocation11 [shape = 'u8[8192]{0}', space=vmem, size = 0x2000, scoped, tag = 'output window, operand 0']
    %9 = vsyncpa [#allocation4], 0
    %s10 = scalar_lea.sflag [#allocation4], 1
    %11 = vsyncpa %s10, 0
    %12 = vsyncpa [#allocation7], 0
    %13 = vsyncpa [#allocation10], 0
    %14 = vsyncpa [#allocation5], 0
    %s15 = scalar_lea.sflag [#allocation5], 1
    %16 = vsyncpa %s15, 0
    loop: start=0, step=1, limit=4
    $region2: #{tpu_custom_call.1} parent=1 // loop_pre_header
      _
    $region3: #{tpu_custom_call.1} parent=1 // loop_header
      %s18 = sphi 0, %s22
      %p19 = scmp.ge.s32.totalorder %s18, 4
      %s25 = sphi 0, %s37
      %s26 = sphi 0, %s33
      %s27 = sphi 0, %s25
      %s28 = sphi 0, %s26
      %s29 = sphi 0, %s27
      %s30 = sphi 0, %s28
      %s40 = sphi 0, %s42
      %s43 = sphi 0, %s40
      %s44 = sphi 0, %s43
      %s60 = sphi 0, %s44
      %s64 = sphi 0, %s64
      %s66 = sphi 0, %s64
      %s67 = sphi 0, %s66
      %s81 = sphi 0, %s67
      %s85 = sphi 0, %s85
      %s87 = sphi 0, %s85
      %s88 = sphi 0, %s87
      %s102 = sphi 0, %s88
      %s106 = sphi 0, %s106
      %s108 = sphi 0, %s106
      %s109 = sphi 0, %s108
      %s123 = sphi 0, %s109
      %s131 = sphi 0, %s133
      %s134 = sphi 0, %s131
      %s135 = sphi 0, %s134
      %s151 = sphi 0, %s135
    $region4: #{tpu_custom_call.1} parent=1 // loop_header_branch
      %21 = sbr.rel (%p19) target = $region8
    $region5: #{tpu_custom_call.1} parent=1 // loop_body
      %s23 = ssub.s32 %s18, 1
      %s24 = ssub.s32 %s18, 2
      %s31 = sadd.s32 1, %s26
      %p32 = scmp.ge.s32.totalorder %s31, 1
      %s33 = scalar_select %p32, 0, %s31
      %s34 = sadd.s32 1, %s25
      %s35 = scalar_select %p32, %s34, %s25
      %p36 = scmp.ge.s32.totalorder %s35, 2
      %s37 = scalar_select %p36, 0, %s35
      %s38 = ssub.s32 %s25, %s37
      %p39 = scmp.eq.s32.totalorder %s38, 0
      %s41 = sadd.s32 %s40, 1
      %s42 = scalar_select %p39, %s40, %s41
      %p45 = pneg %p39
      %p46 = scmp.eq.s32.totalorder %s18, 1
      %p47 = por %p45, %p46
      %p48 = scmp.ne.s32.totalorder %s40, %s43
      %p49 = scmp.eq.s32.totalorder %s18, 0
      %p50 = por %p48, %p49
      %p51 = scmp.ne.s32.totalorder %s40, %s43
      %p52 = scmp.eq.s32.totalorder %s23, 1
      %p53 = por %p51, %p52
      %p54 = scmp.ne.s32.totalorder %s43, %s44
      %p55 = scmp.eq.s32.totalorder %s23, 0
      %p56 = por %p54, %p55
      %p57 = scmp.ne.s32.totalorder %s43, %s44
      %p58 = scmp.eq.s32.totalorder %s24, 1
      %p59 = por %p57, %p58
      %p61 = scmp.ne.s32.totalorder %s44, %s60
      %p62 = scmp.eq.s32.totalorder %s24, 0
      %p63 = por %p61, %p62
      %s65 = sadd.s32 %s64, 1
      %p68 = scmp.eq.s32.totalorder %s18, 1
      %p69 = scmp.ne.s32.totalorder %s64, %s66
      %p70 = scmp.eq.s32.totalorder %s18, 0
      %p71 = por %p69, %p70
      %p72 = scmp.ne.s32.totalorder %s64, %s66
      %p73 = scmp.eq.s32.totalorder %s23, 1
      %p74 = por %p72, %p73
      %p75 = scmp.ne.s32.totalorder %s66, %s67
      %p76 = scmp.eq.s32.totalorder %s23, 0
      %p77 = por %p75, %p76
      %p78 = scmp.ne.s32.totalorder %s66, %s67
      %p79 = scmp.eq.s32.totalorder %s24, 1
      %p80 = por %p78, %p79
      %p82 = scmp.ne.s32.totalorder %s67, %s81
      %p83 = scmp.eq.s32.totalorder %s24, 0
      %p84 = por %p82, %p83
      %s86 = sadd.s32 %s85, 1
      %p89 = scmp.eq.s32.totalorder %s18, 1
      %p90 = scmp.ne.s32.totalorder %s85, %s87
      %p91 = scmp.eq.s32.totalorder %s18, 0
      %p92 = por %p90, %p91
      %p93 = scmp.ne.s32.totalorder %s85, %s87
      %p94 = scmp.eq.s32.totalorder %s23, 1
      %p95 = por %p93, %p94
      %p96 = scmp.ne.s32.totalorder %s87, %s88
      %p97 = scmp.eq.s32.totalorder %s23, 0
      %p98 = por %p96, %p97
      %p99 = scmp.ne.s32.totalorder %s87, %s88
      %p100 = scmp.eq.s32.totalorder %s24, 1
      %p101 = por %p99, %p100
      %p103 = scmp.ne.s32.totalorder %s88, %s102
      %p104 = scmp.eq.s32.totalorder %s24, 0
      %p105 = por %p103, %p104
      %s107 = sadd.s32 %s106, 1
      %p110 = scmp.eq.s32.totalorder %s18, 1
      %p111 = scmp.ne.s32.totalorder %s106, %s108
      %p112 = scmp.eq.s32.totalorder %s18, 0
      %p113 = por %p111, %p112
      %p114 = scmp.ne.s32.totalorder %s106, %s108
      %p115 = scmp.eq.s32.totalorder %s23, 1
      %p116 = por %p114, %p115
      %p117 = scmp.ne.s32.totalorder %s108, %s109
      %p118 = scmp.eq.s32.totalorder %s23, 0
      %p119 = por %p117, %p118
      %p120 = scmp.ne.s32.totalorder %s108, %s109
      %p121 = scmp.eq.s32.totalorder %s24, 1
      %p122 = por %p120, %p121
      %p124 = scmp.ne.s32.totalorder %s109, %s123
      %p125 = scmp.eq.s32.totalorder %s24, 0
      %p126 = por %p124, %p125
      %s127 = ssub.s32 %s25, %s37
      %s128 = ssub.s32 %s26, %s33
      %s129 = sor.u32 %s127, %s128
      %p130 = scmp.eq.s32.totalorder %s129, 0
      %s132 = sadd.s32 %s131, 1
      %s133 = scalar_select %p130, %s131, %s132
      %p136 = pneg %p130
      %p137 = scmp.eq.s32.totalorder %s18, 1
      %p138 = por %p136, %p137
      %p139 = scmp.ne.s32.totalorder %s131, %s134
      %p140 = scmp.eq.s32.totalorder %s18, 0
      %p141 = por %p139, %p140
      %p142 = scmp.ne.s32.totalorder %s131, %s134
      %p143 = scmp.eq.s32.totalorder %s23, 1
      %p144 = por %p142, %p143
      %p145 = scmp.ne.s32.totalorder %s134, %s135
      %p146 = scmp.eq.s32.totalorder %s23, 0
      %p147 = por %p145, %p146
      %p148 = scmp.ne.s32.totalorder %s134, %s135
      %p149 = scmp.eq.s32.totalorder %s24, 1
      %p150 = por %p148, %p149
      %p152 = scmp.ne.s32.totalorder %s135, %s151
      %p153 = scmp.eq.s32.totalorder %s24, 0
      %p154 = por %p152, %p153
      %p155 = scmp.le.s32.totalorder 1, %s18
      %p156 = scmp.lt.s32.totalorder %s18, 3
      %p157 = pnand %p155, %p156
      %p158 = pneg %p157
      // Predicated region
      $region9: #{tpu_custom_call.1} parent=5 // pred_check
        _
      $region10: #{tpu_custom_call.1} parent=5 // pred_check_branch
        %160 = sbr.rel (%p157) target = $region12
      $region11: #{tpu_custom_call.1} parent=5 // pred_region
        %s161 = ssub.s32 %s18, 1
        // Predicated region
        $region13: #{tpu_custom_call.1} parent=11 // pred_check
          %p162 = pneg %p77
        $region14: #{tpu_custom_call.1} parent=11 // pred_check_branch
          %164 = sbr.rel (%p162) target = $region16
        $region15: #{tpu_custom_call.1} parent=11 // pred_region
          %s166 = ssub.s32 64, 64
          %167 = vsyncadd [#allocation7], %s166
          %s169 = sshll.u32 [#allocation6], 4
          %s170 = int_to_ptr.vmem [resolvable:$true] %s169
          %172 = dma.hbm_to_vmem [thread:$0]  %s1, 64, %s170, [#allocation7]
        $region16: #{tpu_custom_call.1} parent=11 // pred_fallthru
          _
        // Predicated region
        $region17: #{tpu_custom_call.1} parent=11 // pred_check
          %p173 = pneg %p98
        $region18: #{tpu_custom_call.1} parent=11 // pred_check_branch
          %175 = sbr.rel (%p173) target = $region20
        $region19: #{tpu_custom_call.1} parent=11 // pred_region
          %s177 = ssub.s32 128, 128
          %178 = vsyncadd [#allocation7], %s177
          %s180 = sshll.u32 [#allocation8], 4
          %s181 = int_to_ptr.vmem [resolvable:$true] %s180
          %183 = dma.hbm_to_vmem [thread:$0]  %s2, 128, %s181, [#allocation7]
        $region20: #{tpu_custom_call.1} parent=11 // pred_fallthru
          _
        // Predicated region
        $region21: #{tpu_custom_call.1} parent=11 // pred_check
          %p184 = pneg %p119
        $region22: #{tpu_custom_call.1} parent=11 // pred_check_branch
          %186 = sbr.rel (%p184) target = $region24
        $region23: #{tpu_custom_call.1} parent=11 // pred_region
          %s188 = ssub.s32 128, 128
          %189 = vsyncadd [#allocation10], %s188
          %s191 = sshll.u32 [#allocation9], 4
          %s192 = int_to_ptr.vmem [resolvable:$true] %s191
          %194 = dma.hbm_to_vmem [thread:$0]  %s3, 128, %s192, [#allocation10]
        $region24: #{tpu_custom_call.1} parent=11 // pred_fallthru
          _
      $region12: #{tpu_custom_call.1} parent=5 // pred_fallthru
        _
      %p195 = scmp.lt.s32.totalorder %s18, 2
      // Predicated region
      $region25: #{tpu_custom_call.1} parent=5 // pred_check
        %p196 = pneg %p195
      $region26: #{tpu_custom_call.1} parent=5 // pred_check_branch
        %198 = sbr.rel (%p196) target = $region28
      $region27: #{tpu_custom_call.1} parent=5 // pred_region
        // Predicated region
        $region29: #{tpu_custom_call.1} parent=27 // pred_check
          %p199 = pneg %p50
        $region30: #{tpu_custom_call.1} parent=27 // pred_check_branch
          %201 = sbr.rel (%p199) target = $region32
        $region31: #{tpu_custom_call.1} parent=27 // pred_region
          %s202 = sand.u32 %s40, 1
          %s203 = scalar_lea.sflag [#allocation4], %s202
          %s204 = sand.u32 %s40, 1
          %s205 = smul.addr %s204, 4
          %s206 = scalar_lea.vmem [#allocation3], %s205
          %s208 = ssub.s32 64, 64
          %209 = vsyncadd %s203, %s208
          %s210 = smul.addr %s25, 64
          %s211 = scalar_lea.hbm %s0, %s210
          %s213 = sshll.u32 %s206, 4
          %s214 = int_to_ptr.vmem [resolvable:$true] %s213
          %216 = dma.hbm_to_vmem [thread:$0]  %s211, 64, %s214, %s203
        $region32: #{tpu_custom_call.1} parent=27 // pred_fallthru
          _
      $region28: #{tpu_custom_call.1} parent=5 // pred_fallthru
        _
      %p217 = scmp.le.s32.totalorder 1, %s18
      %p218 = scmp.lt.s32.totalorder %s18, 3
      %p219 = pnand %p217, %p218
      %p220 = pneg %p219
      // Predicated region
      $region33: #{tpu_custom_call.1} parent=5 // pred_check
        _
      $region34: #{tpu_custom_call.1} parent=5 // pred_check_branch
        %222 = sbr.rel (%p219) target = $region36
      $region35: #{tpu_custom_call.1} parent=5 // pred_region
        %s223 = ssub.s32 %s18, 1
        %s224 = sand.u32 %s43, 1
        %s225 = scalar_lea.sflag [#allocation4], %s224
        %s226 = sand.u32 %s43, 1
        %s227 = smul.addr %s226, 4
        %s228 = scalar_lea.vmem [#allocation3], %s227
        // Predicated region
        $region37: #{tpu_custom_call.1} parent=35 // pred_check
          %p229 = pneg %p56
        $region38: #{tpu_custom_call.1} parent=35 // pred_check_branch
          %231 = sbr.rel (%p229) target = $region40
        $region39: #{tpu_custom_call.1} parent=35 // pred_region
          %232 = dma.done %s225, 64
        $region40: #{tpu_custom_call.1} parent=35 // pred_fallthru
          _
        // Predicated region
        $region41: #{tpu_custom_call.1} parent=35 // pred_check
          %p233 = pneg %p77
        $region42: #{tpu_custom_call.1} parent=35 // pred_check_branch
          %235 = sbr.rel (%p233) target = $region44
        $region43: #{tpu_custom_call.1} parent=35 // pred_region
          %236 = dma.done [#allocation7], 64
        $region44: #{tpu_custom_call.1} parent=35 // pred_fallthru
          _
        // Predicated region
        $region45: #{tpu_custom_call.1} parent=35 // pred_check
          %p237 = pneg %p98
        $region46: #{tpu_custom_call.1} parent=35 // pred_check_branch
          %239 = sbr.rel (%p237) target = $region48
        $region47: #{tpu_custom_call.1} parent=35 // pred_region
          %240 = dma.done [#allocation7], 128
        $region48: #{tpu_custom_call.1} parent=35 // pred_fallthru
          _
        // Predicated region
        $region49: #{tpu_custom_call.1} parent=35 // pred_check
          %p241 = pneg %p119
        $region50: #{tpu_custom_call.1} parent=35 // pred_check_branch
          %243 = sbr.rel (%p241) target = $region52
        $region51: #{tpu_custom_call.1} parent=35 // pred_region
          %244 = dma.done [#allocation10], 128
        $region52: #{tpu_custom_call.1} parent=35 // pred_fallthru
          _
        %s245 = sand.u32 %s43, 1
        %s246 = scalar_lea.sflag [#allocation4], %s245
        %s247 = sand.u32 %s43, 1
        %s248 = smul.addr %s247, 4
        %s249 = scalar_lea.vmem [#allocation3], %s248
        %p250 = pneg %p56
        %p251 = pneg %p53
        %p252 = pneg %p77
        %p253 = pneg %p74
        %p254 = pneg %p98
        %p255 = pneg %p95
        %p256 = pneg %p119
        %p257 = pneg %p116
        %p258 = pneg %p147
        %p259 = pneg %p144
        %s260 = sand.u32 %s134, 1
        %s261 = scalar_lea.sflag [#allocation5], %s260
        %s262 = sand.u32 %s134, 1
        %s263 = smul.addr %s262, 8
        %s264 = scalar_lea.vmem [#allocation11], %s263
        %p265 = scmp.eq.s32.totalorder %s28, 0
        // Predicated region
        $region53: #{tpu_custom_call.1} parent=35 // pred_check
          %p266 = pneg %p265
        $region54: #{tpu_custom_call.1} parent=35 // pred_check_branch
          %268 = sbr.rel (%p266) target = $region56
        $region55: #{tpu_custom_call.1} parent=35 // pred_region
          %vm269 = vcmask 3072
          %270 = vst.msk [vmem:[#allocation2] sm:$0xf] %vm269, 0.0
          %v271 = vld [vmem:[%s228] sm:$0xf]
          %273 = vrot.lane.b32.xlu0 %v271, 1
          %v274 = vpop.permute.xlu0 %273
          %vm276 = vcmask 134152
          %277 = vst.msk [vmem:[#allocation2] sm:$0xf] %vm276, %v274
          %vm278 = vcmask 142472
          %279 = vst.msk [vmem:[#allocation2] sm:$0xf] %vm278, 0.0
        $region56: #{tpu_custom_call.1} parent=35 // pred_fallthru
          _
        %v280 = vld [vmem:[#allocation6] sm:$0xf]
        %v281 = vld [vmem:[#allocation8] sm:$0xff]
        %v282 = vld [vmem:[#allocation9] sm:$0xff]
        %v283 = vld [vmem:[#allocation2] sm:$0xf]
        %285 = vset.pattern.permute.xlu0 0
        %286 = vperm.xlu0 %285, %v280
        %v287 = vpop.permute.xlu0 %286
        %v289 = vmul.f32 %v283, %v287
        %v290 = vadd.f32 %v289, 0.0
        %291 = vset.pattern.permute.xlu0 1
        %292 = vperm.xlu0 %291, %v280
        %v293 = vpop.permute.xlu0 %292
        %v295 = vmul.f32 %v283, %v293
        %297 = vrot.lane.b32.xlu0 %v295, 127
        %v298 = vpop.permute.xlu0 %297
        %v300 = vadd.f32 %v290, %v298
        %301 = vset.pattern.permute.xlu0 2
        %302 = vperm.xlu0 %301, %v280
        %v303 = vpop.permute.xlu0 %302
        %v305 = vmul.f32 %v283, %v303
        %307 = vrot.lane.b32.xlu0 %v305, 126
        %v308 = vpop.permute.xlu0 %307
        %v310 = vadd.f32 %v300, %v308
        %312 = vset.pattern.permute.xlu0 0
        %313 = vperm.xlu0 %312, %v282
        %v314 = vpop.permute.xlu0 %313
        %vm316 = vcmask 31744
        %v318 = vsel %vm316, %v281, 0
        %vm320 = vcmask 1043456
        %v322 = vsel %vm320, %v310, 0
        %324 = vmatprep.subr.mxu0 0.0
        %325 = vmatpush1.msra.mxu0 %v322
        %326 = vmatprep.subr.mxu0 0.0
        %327 = vmatpush1.msra.mxu0 0.0
        %328 = vmatprep.subr.mxu0 0.0
        %329 = vmatpush1.msra.mxu0 0.0
        %330 = vmatprep.subr.mxu0 0.0
        %331 = vmatpush1.msra.mxu0 0.0
        %332 = vmatprep.subr.mxu0 0.0
        %333 = vmatpush1.msra.mxu0 0.0
        %334 = vmatprep.subr.mxu0 0.0
        %335 = vmatpush1.msra.mxu0 0.0
        %336 = vmatprep.subr.mxu0 0.0
        %337 = vmatpush1.msra.mxu0 0.0
        %338 = vmatprep.subr.mxu0 0.0
        %339 = vmatpush1.msra.mxu0 0.0
        %340 = vmatprep.subr.mxu0 0.0
        %341 = vmatpush1.msra.mxu0 0.0
        %342 = vmatprep.subr.mxu0 0.0
        %343 = vmatpush1.msra.mxu0 0.0
        %344 = vmatprep.subr.mxu0 0.0
        %345 = vmatpush1.msra.mxu0 0.0
        %346 = vmatprep.subr.mxu0 0.0
        %347 = vmatpush1.msra.mxu0 0.0
        %348 = vmatprep.subr.mxu0 0.0
        %349 = vmatpush1.msra.mxu0 0.0
        %350 = vmatprep.subr.mxu0 0.0
        %351 = vmatpush1.msra.mxu0 0.0
        %352 = vmatprep.subr.mxu0 0.0
        %353 = vmatpush1.msra.mxu0 0.0
        %354 = vmatprep.subr.mxu0 0.0
        %355 = vmatpush1.msra.mxu0 0.0
        %356 = vmatprep.subr.mxu0 0.0
        %357 = vmatpush1.msra.mxu0 0.0
        %358 = vmatprep.subr.mxu0 0.0
        %359 = vmatpush1.msra.mxu0 0.0
        %360 = vmatprep.subr.mxu0 0.0
        %361 = vmatpush1.msra.mxu0 0.0
        %362 = vmatprep.subr.mxu0 0.0
        %363 = vmatpush1.msra.mxu0 0.0
        %364 = vmatprep.subr.mxu0 0.0
        %365 = vmatpush1.msra.mxu0 0.0
        %366 = vmatprep.subr.mxu0 0.0
        %367 = vmatpush1.msra.mxu0 0.0
        %368 = vmatprep.subr.mxu0 0.0
        %369 = vmatpush1.msra.mxu0 0.0
        %370 = vmatprep.subr.mxu0 0.0
        %371 = vmatpush1.msra.mxu0 0.0
        %372 = vmatprep.subr.mxu0 0.0
        %373 = vmatpush1.msra.mxu0 0.0
        %374 = vmatprep.subr.mxu0 0.0
        %375 = vmatpush1.msra.mxu0 0.0
        %376 = vmatprep.subr.mxu0 0.0
        %377 = vmatpush1.msra.mxu0 0.0
        %378 = vmatprep.subr.mxu0 0.0
        %379 = vmatpush1.msra.mxu0 0.0
        %380 = vmatprep.subr.mxu0 0.0
        %381 = vmatpush1.msra.mxu0 0.0
        %382 = vmatprep.subr.mxu0 0.0
        %383 = vmatpush1.msra.mxu0 0.0
        %384 = vmatprep.subr.mxu0 0.0
        %385 = vmatpush1.msra.mxu0 0.0
        %386 = vmatprep.subr.mxu0 0.0
        %387 = vmatpush1.msra.mxu0 0.0
        %388 = vmatprep.mubr.f32.mxu0 0.0
        %389 = vmatmul.mubr.f32.gmra.mrb[0].mxu0 %v318
        %v390 = vpop.f32.mrb[0].mxu0
        %v391 = vadd.f32 %v314, %v390
        %v392 = vpop.f32.mrb[0].mxu0
        %393 = vdwg.mxu0
        %vm394 = vcmask 130048
        %395 = vst.msk [vmem:[%s264] sm:$0xff] %vm394, %v391
        %s396 = sand.u32 %s134, 1
        %s397 = scalar_lea.sflag [#allocation5], %s396
        %s398 = sand.u32 %s134, 1
        %s399 = smul.addr %s398, 8
        %s400 = scalar_lea.vmem [#allocation11], %s399
        // Predicated region
        $region57: #{tpu_custom_call.1} parent=35 // pred_check
          %p401 = pneg %p144
        $region58: #{tpu_custom_call.1} parent=35 // pred_check_branch
          %403 = sbr.rel (%p401) target = $region60
        $region59: #{tpu_custom_call.1} parent=35 // pred_region
          %s405 = ssub.s32 128, 128
          %406 = vsyncadd %s397, %s405
          %s407 = sadd.s32 %s28, %s27
          %s408 = smul.addr %s407, 128
          %s409 = scalar_lea.hbm %s4, %s408
          %s411 = sshll.u32 %s400, 4
          %s412 = int_to_ptr.vmem [resolvable:$true] %s411
          %414 = dma.vmem_to_hbm [thread:$0]  %s412, 128, %s409, %s397
        $region60: #{tpu_custom_call.1} parent=35 // pred_fallthru
          _
      $region36: #{tpu_custom_call.1} parent=5 // pred_fallthru
        _
      %p415 = scmp.le.s32.totalorder 2, %s18
      // Predicated region
      $region61: #{tpu_custom_call.1} parent=5 // pred_check
        %p416 = pneg %p415
      $region62: #{tpu_custom_call.1} parent=5 // pred_check_branch
        %418 = sbr.rel (%p416) target = $region64
      $region63: #{tpu_custom_call.1} parent=5 // pred_region
        %s419 = ssub.s32 %s18, 2
        // Predicated region
        $region65: #{tpu_custom_call.1} parent=63 // pred_check
          %p420 = pneg %p150
        $region66: #{tpu_custom_call.1} parent=63 // pred_check_branch
          %422 = sbr.rel (%p420) target = $region68
        $region67: #{tpu_custom_call.1} parent=63 // pred_region
          %s423 = sand.u32 %s135, 1
          %s424 = scalar_lea.sflag [#allocation5], %s423
          %s425 = sand.u32 %s135, 1
          %s426 = smul.addr %s425, 8
          %s427 = scalar_lea.vmem [#allocation11], %s426
          %428 = dma.done %s424, 128
        $region68: #{tpu_custom_call.1} parent=63 // pred_fallthru
          _
      $region64: #{tpu_custom_call.1} parent=5 // pred_fallthru
        _
    $region6: #{tpu_custom_call.1} parent=1 // loop_footer
      %s22 = sadd.s32 1, %s18
    $region7: #{tpu_custom_call.1} parent=1 // loop_footer_branch
      %17 = sbr.rel target = $region3
    $region8: #{tpu_custom_call.1} parent=1 // loop_exit
      _
    %429 = vsyncpa [#allocation4], 1
    %s430 = scalar_lea.sflag [#allocation4], 1
    %431 = vsyncpa %s430, 1
    %432 = vsyncpa [#allocation7], 1
    %433 = vsyncpa [#allocation10], 1
    %434 = vsyncpa [#allocation5], 1
    %s435 = scalar_lea.sflag [#allocation5], 1
    %436 = vsyncpa %s435, 1

</llo_original>
